<compile_context>
chip_gen: v5e
topology: v5e:2x2
jax: 0.10.0
libtpu: 0.0.40
codegen_flags: <defaults>
</compile_context>

<pallas_src>
import functools

import jax
import jax.numpy as jnp
from jax import lax
from jax.experimental import pallas as pl
from jax.experimental.pallas import tpu as pltpu


# ----------------------------------------------------------------------------------
# Channel attention: tiny (1, D) MLP, hoisted out of the kernels (plain JAX/XLA).
# ----------------------------------------------------------------------------------
def _channel_attn(text_feat, w1, b1, w2, b2):
    tmean = jnp.mean(text_feat.astype(jnp.float32), axis=0, keepdims=True)      # (1, D)
    h = jnp.maximum(tmean @ w1.T + b1, 0.0)
    return jax.nn.sigmoid(h @ w2.T + b2)                                        # (1, D)


# ----------------------------------------------------------------------------------
# Fused fast path: whole problem resident in VMEM, one kernel invocation.
# ----------------------------------------------------------------------------------
def _fused_kernel(img_ref, txt_ref, cattn_ref, alpha_ref, out_ref, *, scores_dtype):
    t = txt_ref.shape[0]
    # lane-dense (T, N) scores: T sublanes, N lanes
    scores = lax.dot_general(txt_ref[...].astype(scores_dtype),
                             img_ref[...].astype(scores_dtype),
                             (((1,), (1,)), ((), ())),
                             preferred_element_type=jnp.float32)                # (T, N)
    m = jnp.max(scores, axis=1, keepdims=True)                                  # (T, 1)
    e = jnp.exp(scores - m)                                                     # (T, N)
    l = jnp.sum(e, axis=1, keepdims=True)                                       # (T, 1)
    w = (alpha_ref[0, 0] / t) * pl.reciprocal(l, approx=False)                  # (T, 1)
    # per-image-token spatial factor straight to (N, 1) via an MXU matvec over T
    spatial = lax.dot_general(e, w, (((0,), (0,)), ((), ())),
                              preferred_element_type=jnp.float32)               # (N, 1)
    img = img_ref[...].astype(jnp.float32)
    out_ref[...] = (img * cattn_ref[...] * (1.0 + spatial)).astype(out_ref.dtype)


# ----------------------------------------------------------------------------------
# Pass A (two-pass path): online softmax statistics over N per text token.
# Accumulates directly into the resident (T, 1) output refs; finalize folds
# alpha / (T * l) so pass B only needs a matvec.
# ----------------------------------------------------------------------------------
def _stats_kernel(img_ref, txt_ref, alpha_ref, m_ref, w_ref, *, n_valid, scores_dtype):
    i = pl.program_id(0)
    tile_n = img_ref.shape[0]
    t = txt_ref.shape[0]

    @pl.when(i == 0)
    def _init():
        m_ref[...] = jnp.full(m_ref.shape, -jnp.inf, m_ref.dtype)
        w_ref[...] = jnp.zeros(w_ref.shape, w_ref.dtype)

    scores = lax.dot_general(txt_ref[...].astype(scores_dtype),
                             img_ref[...].astype(scores_dtype),
                             (((1,), (1,)), ((), ())),
                             preferred_element_type=jnp.float32)                # (T, tile_n)

    # mask image tokens past the true N (edge tile of the cdiv grid -- no host pad)
    col = i * tile_n + lax.broadcasted_iota(jnp.int32, (1, tile_n), 1)
    scores = jnp.where(col < n_valid, scores, -jnp.inf)

    tile_max = jnp.max(scores, axis=1, keepdims=True)                           # (T, 1)
    e = jnp.exp(scores - tile_max)                                              # masked -> 0
    tile_sum = jnp.sum(e, axis=1, keepdims=True)                                # (T, 1)

    m_old = m_ref[...]
    m_new = jnp.maximum(m_old, tile_max)
    w_ref[...] = (w_ref[...] * jnp.exp(m_old - m_new)
                  + tile_sum * jnp.exp(tile_max - m_new))
    m_ref[...] = m_new

    @pl.when(i == pl.num_programs(0) - 1)
    def _finalize():
        # fold alpha / (T * l) into the per-text weight exactly once
        w_ref[...] = (alpha_ref[0, 0] / t) * pl.reciprocal(w_ref[...], approx=False)


# ----------------------------------------------------------------------------------
# Pass B (two-pass path): apply channel + spatial attention, fully parallel over N.
# ----------------------------------------------------------------------------------
def _apply_kernel(img_ref, txt_ref, cattn_ref, m_ref, w_ref, out_ref, *, scores_dtype):
    # scores matmul consumes the image tile straight from VMEM in scores_dtype; the f32
    # tile is re-read afterwards so it is never live across the MXU call.
    scores = lax.dot_general(txt_ref[...].astype(scores_dtype),
                             img_ref[...].astype(scores_dtype),
                             (((1,), (1,)), ((), ())),
                             preferred_element_type=jnp.float32)                # (T, tile_n)
    e = jnp.exp(scores - m_ref[...])                                            # lane-dense exp
    spatial = lax.dot_general(e, w_ref[...], (((0,), (0,)), ((), ())),
                              preferred_element_type=jnp.float32)               # (tile_n, 1)
    img = img_ref[...].astype(jnp.float32)
    out_ref[...] = (img * cattn_ref[...] * (1.0 + spatial)).astype(out_ref.dtype)


# ----------------------------------------------------------------------------------
# Wrapper
# ----------------------------------------------------------------------------------
def inject_saca(image_feat, text_feat, w1, b1, w2, b2, alpha,
                *, tile_n=None, scores_dtype=jnp.float32, force_two_pass=False):
    """image_feat: (N, D), text_feat: (T, D); w1/w2 in torch Linear (out, in) layout."""
    N, D = image_feat.shape
    T, D2 = text_feat.shape
    assert D == D2

    # tiny channel MLP in plain JAX (keeps D x D weights out of VMEM entirely)
    cattn = _channel_attn(text_feat, w1, b1, w2, b2)                             # (1, D) f32
    alpha_arr = jnp.asarray(alpha, jnp.float32).reshape(1, 1)
    txt = (text_feat if text_feat.dtype == scores_dtype
           else text_feat.astype(scores_dtype))                                 # cast once

    # generation-aware VMEM budget: half of physical, capped at 64 MiB
    # (=> ~32 MiB on v7x, 64 MiB on v5e/v6e)
    vmem_cap = 128 * 1024 * 1024
    try:
        vmem_cap = int(getattr(pltpu.get_tpu_info(), "vmem_capacity_bytes", vmem_cap))
    except Exception:
        pass
    vmem_budget = int(min(vmem_cap // 2, 64 * 1024 * 1024))

    itemsize = jnp.dtype(image_feat.dtype).itemsize
    align = max(8, 32 // itemsize)            # dtype-aware sublane alignment (f32:8, bf16:16)

    resident = lambda i: (0, 0)
    tiled = lambda i: (i, 0)
    smem_spec = pl.BlockSpec(memory_space=pltpu.MemorySpace.SMEM)

    # ---- fused fast path: everything resident in VMEM, single launch -------------
    fused_bytes = 4 * (4 * N * D + 2 * T * D + 4 * T * N + 4 * D)
    if not force_two_pass and fused_bytes <= vmem_budget // 2:
        return pl.pallas_call(
            functools.partial(_fused_kernel, scores_dtype=scores_dtype),
            grid=(1,),
            in_specs=[
                pl.BlockSpec((N, D), resident),       # image (resident)
                pl.BlockSpec((T, D), resident),       # text
                pl.BlockSpec((1, D), resident),       # channel attention
                smem_spec,                            # alpha scalar
            ],
            out_specs=pl.BlockSpec((N, D), resident),
            out_shape=jax.ShapeDtypeStruct((N, D), image_feat.dtype),
            compiler_params=pltpu.CompilerParams(vmem_limit_bytes=vmem_budget),
            cost_estimate=pl.CostEstimate(
                flops=int(2 * N * T * D + 2 * N * T + 3 * N * D),
                transcendentals=int(N * T),
                bytes_accessed=int(4 * (2 * N * D + T * D + D + 1))),
        )(image_feat, txt, cattn, alpha_arr)

    # ---- two-pass path: pipelined online softmax over N tiles --------------------
    if tile_n is None:
        # biggest tile that leaves headroom for in/out double-buffering + residents
        tile_n = vmem_budget // (8 * D * 4)
        tile_n = min(2048, tile_n)
    tile_n = min(tile_n, N)
    tile_n = max(align, (tile_n // align) * align)
    num_tiles = pl.cdiv(N, tile_n)

    # pass A: per-text softmax stats (m, w = alpha/(T*l)) over all image tokens
    m, w = pl.pallas_call(
        functools.partial(_stats_kernel, n_valid=N, scores_dtype=scores_dtype),
        grid=(num_tiles,),
        in_specs=[
            pl.BlockSpec((tile_n, D), tiled),         # image tiles (pipelined, no host pad)
            pl.BlockSpec((T, D), resident),           # text (resident in VMEM)
            smem_spec,                                # alpha scalar
        ],
        out_specs=(
            pl.BlockSpec((T, 1), resident),           # m: per-text running max
            pl.BlockSpec((T, 1), resident),           # w: exp-sum -> alpha/(T*l) at finalize
        ),
        out_shape=(
            jax.ShapeDtypeStruct((T, 1), jnp.float32),
            jax.ShapeDtypeStruct((T, 1), jnp.float32),
        ),
        compiler_params=pltpu.CompilerParams(
            dimension_semantics=("arbitrary",),       # sequential reduction over N tiles
            vmem_limit_bytes=vmem_budget),
        cost_estimate=pl.CostEstimate(
            flops=int(2 * N * T * D + 8 * N * T),
            transcendentals=int(N * T + 4 * T * num_tiles),
            bytes_accessed=int(4 * (N * D + T * D + 2 * T + 1))),
    )(image_feat, txt, alpha_arr)

    # pass B: apply channel + spatial attention, fully parallel over N tiles
    out = pl.pallas_call(
        functools.partial(_apply_kernel, scores_dtype=scores_dtype),
        grid=(num_tiles,),
        in_specs=[
            pl.BlockSpec((tile_n, D), tiled),         # image tiles (pipelined)
            pl.BlockSpec((T, D), resident),           # text
            pl.BlockSpec((1, D), resident),           # channel attention
            pl.BlockSpec((T, 1), resident),           # m
            pl.BlockSpec((T, 1), resident),           # w = alpha/(T*l)
        ],
        out_specs=pl.BlockSpec((tile_n, D), tiled),
        out_shape=jax.ShapeDtypeStruct((N, D), image_feat.dtype),
        compiler_params=pltpu.CompilerParams(
            dimension_semantics=("parallel",),        # split N tiles across v7x TCs
            vmem_limit_bytes=vmem_budget),
        cost_estimate=pl.CostEstimate(
            flops=int(2 * N * T * D + 2 * N * T + 3 * N * D),
            transcendentals=int(N * T),
            bytes_accessed=int(4 * (2 * N * D + T * D + D + 2 * T))),
    )(image_feat, txt, cattn, m, w)
    return out


# ----------------------------------------------------------------------------------
# Pure-JAX reference mirroring the PyTorch forward
# ----------------------------------------------------------------------------------
def inject_saca_ref(image_feat, text_feat, w1, b1, w2, b2, alpha):
    image_feat1 = image_feat
    text_mean = jnp.mean(text_feat, axis=0, keepdims=True)
    h = jnp.maximum(text_mean @ w1.T + b1, 0.0)
    channel_attn = jax.nn.sigmoid(h @ w2.T + b2)
    img = image_feat * channel_attn
    scores = text_feat @ image_feat1.T
    attn = jax.nn.softmax(scores, axis=-1)
    spatial = jnp.mean(attn, axis=0)
    return img * (1.0 + alpha * spatial[:, None])


if __name__ == "__main__":
    embed_dim = 128     # D: full 128-lane dense last dim (unmasked stores)
    n_img = 197         # image tokens (ViT-style 14x14 + CLS; exercises edge-tile masking)
    n_txt = 8           # text tokens

    key = jax.random.PRNGKey(0)
    k_img, k_txt, k_w1, k_b1, k_w2, k_b2 = jax.random.split(key, 6)

    image_feat = jax.random.normal(k_img, (n_img, embed_dim), dtype=jnp.float32)
    text_feat = jax.random.normal(k_txt, (n_txt, embed_dim), dtype=jnp.float32)

    scale = 1.0 / jnp.sqrt(embed_dim)
    w1 = jax.random.uniform(k_w1, (embed_dim, embed_dim), jnp.float32, -scale, scale)
    b1 = jax.random.uniform(k_b1, (embed_dim,), jnp.float32, -scale, scale)
    w2 = jax.random.uniform(k_w2, (embed_dim, embed_dim), jnp.float32, -scale, scale)
    b2 = jax.random.uniform(k_b2, (embed_dim,), jnp.float32, -scale, scale)
    alpha = 1.0  # nn.Parameter(torch.tensor(1.0))

    ref = inject_saca_ref(image_feat, text_feat, w1, b1, w2, b2, alpha)

    # 1) default path -> fused single-launch kernel (whole problem resident in VMEM)
    out_fused = inject_saca(image_feat, text_feat, w1, b1, w2, b2, alpha)
    out_fused = jax.block_until_ready(out_fused)
    assert out_fused.shape == (n_img, embed_dim)
    assert jnp.allclose(out_fused, ref, atol=1e-4, rtol=1e-4), "fused path mismatch"

    # 2) forced two-pass path with tile_n=64 -> exercises the pipelined online-softmax
    #    stats pass, the edge-tile masking (197 % 64 != 0, no host-side pad) and pass B.
    out_2p = inject_saca(image_feat, text_feat, w1, b1, w2, b2, alpha,
                         tile_n=64, force_two_pass=True)
    out_2p = jax.block_until_ready(out_2p)
    assert out_2p.shape == (n_img, embed_dim)
    assert jnp.allclose(out_2p, ref, atol=1e-4, rtol=1e-4), "two-pass path mismatch"

    print("KERNEL_OK")
</pallas_src>

<mosaic_0001>
module attributes {stable_mosaic.version = 11 : i64} {
  func.func @_fused_kernel(%arg0: i32, %arg1: memref<197x128xf32, #tpu.memory_space<vmem>>, %arg2: memref<8x128xf32, #tpu.memory_space<vmem>>, %arg3: memref<1x128xf32, #tpu.memory_space<vmem>>, %arg4: memref<1x1xf32, #tpu.memory_space<smem>>, %arg5: memref<197x128xf32, #tpu.memory_space<vmem>>) attributes {dimension_semantics = [#tpu.dimension_semantics<arbitrary>], iteration_bounds = array<i64: 1>, scalar_prefetch = 0 : i64, scratch_operands = 0 : i64, tpu.core_type = #tpu.core_type<tc>, window_params = [{pipeline_mode = #tpu.pipeline_mode<synchronous>, transform_indices = @transform_0, window_bounds = array<i64: 197, 128>}, {pipeline_mode = #tpu.pipeline_mode<synchronous>, transform_indices = @transform_1, window_bounds = array<i64: 8, 128>}, {pipeline_mode = #tpu.pipeline_mode<synchronous>, transform_indices = @transform_2, window_bounds = array<i64: 1, 128>}, {transform_indices = @transform_3, window_bounds = array<i64: 1, 1>}, {pipeline_mode = #tpu.pipeline_mode<synchronous>, transform_indices = @transform_4, window_bounds = array<i64: 197, 128>}]} {
    %c0 = arith.constant 0 : index
    %c0_0 = arith.constant 0 : index
    %0 = vector.load %arg2[%c0, %c0_0] : memref<8x128xf32, #tpu.memory_space<vmem>>, vector<8x128xf32>
    %c0_1 = arith.constant 0 : index
    %c0_2 = arith.constant 0 : index
    %1 = vector.load %arg1[%c0_1, %c0_2] : memref<197x128xf32, #tpu.memory_space<vmem>>, vector<197x128xf32>
    %cst = arith.constant dense<0.000000e+00> : vector<8x197xf32>
    %2 = tpu.matmul %0, %1, %cst {dimension_numbers = #tpu.dot_dimension_numbers<[1], [1], [0], [0], [0, 0, 1, 0], [], []>} : vector<8x128xf32>, vector<197x128xf32>, vector<8x197xf32> -> vector<8x197xf32>
    %cst_3 = arith.constant dense<0xFF800000> : vector<8xf32>
    %3 = vector.multi_reduction <maximumf>, %2, %cst_3 [1] : vector<8x197xf32> to vector<8xf32>
    %4 = vector.shape_cast %3 : vector<8xf32> to vector<8x1xf32>
    %5 = vector.broadcast %4 : vector<8x1xf32> to vector<8x197xf32>
    %6 = arith.subf %2, %5 : vector<8x197xf32>
    %7 = math.exp %6 : vector<8x197xf32>
    %cst_4 = arith.constant dense<0.000000e+00> : vector<8xf32>
    %8 = vector.multi_reduction <add>, %7, %cst_4 [1] : vector<8x197xf32> to vector<8xf32>
    %9 = vector.shape_cast %8 : vector<8xf32> to vector<8x1xf32>
    %c0_5 = arith.constant 0 : index
    %c0_6 = arith.constant 0 : index
    %10 = memref.load %arg4[%c0_5, %c0_6] : memref<1x1xf32, #tpu.memory_space<smem>>
    %cst_7 = arith.constant 8.000000e+00 : f32
    %11 = arith.divf %10, %cst_7 : f32
    %12 = tpu.reciprocal %9 : vector<8x1xf32> -> vector<8x1xf32>
    %13 = vector.broadcast %11 : f32 to vector<8x1xf32>
    %14 = arith.mulf %13, %12 : vector<8x1xf32>
    %cst_8 = arith.constant dense<0.000000e+00> : vector<197x1xf32>
    %15 = tpu.matmul %7, %14, %cst_8 {dimension_numbers = #tpu.dot_dimension_numbers<[0], [0], [1], [1], [0, 1, 1, 1], [], []>} : vector<8x197xf32>, vector<8x1xf32>, vector<197x1xf32> -> vector<197x1xf32>
    %c0_9 = arith.constant 0 : index
    %c0_10 = arith.constant 0 : index
    %16 = vector.load %arg1[%c0_9, %c0_10] : memref<197x128xf32, #tpu.memory_space<vmem>>, vector<197x128xf32>
    %c0_11 = arith.constant 0 : index
    %c0_12 = arith.constant 0 : index
    %17 = vector.load %arg3[%c0_11, %c0_12] : memref<1x128xf32, #tpu.memory_space<vmem>>, vector<1x128xf32>
    %18 = vector.broadcast %17 : vector<1x128xf32> to vector<197x128xf32>
    %19 = arith.mulf %16, %18 : vector<197x128xf32>
    %cst_13 = arith.constant 1.000000e+00 : f32
    %20 = vector.broadcast %cst_13 : f32 to vector<197x1xf32>
    %21 = arith.addf %20, %15 : vector<197x1xf32>
    %22 = vector.broadcast %21 : vector<197x1xf32> to vector<197x128xf32>
    %23 = arith.mulf %19, %22 : vector<197x128xf32>
    %c0_14 = arith.constant 0 : index
    %c0_15 = arith.constant 0 : index
    %24 = vector.load %arg5[%c0_14, %c0_15] : memref<197x128xf32, #tpu.memory_space<vmem>>, vector<197x128xf32>
    tpu.vector_store %arg5[%c0_14, %c0_15], %23 {strides = array<i32>} : memref<197x128xf32, #tpu.memory_space<vmem>>, vector<197x128xf32>,
    return
  }
  func.func @transform_0(%arg0: i32) -> (i32, i32) {
    %c0_i32 = arith.constant 0 : i32
    %c0_i32_0 = arith.constant 0 : i32
    %c0_i32_1 = arith.constant 0 : i32
    return %c0_i32, %c0_i32_0 : i32, i32
  }
  func.func @transform_1(%arg0: i32) -> (i32, i32) {
    %c0_i32 = arith.constant 0 : i32
    %c0_i32_0 = arith.constant 0 : i32
    %c0_i32_1 = arith.constant 0 : i32
    return %c0_i32, %c0_i32_0 : i32, i32
  }
  func.func @transform_2(%arg0: i32) -> (i32, i32) {
    %c0_i32 = arith.constant 0 : i32
    %c0_i32_0 = arith.constant 0 : i32
    %c0_i32_1 = arith.constant 0 : i32
    return %c0_i32, %c0_i32_0 : i32, i32
  }
  func.func @transform_3(%arg0: i32) -> (i32, i32) {
    %c0_i32 = arith.constant 0 : i32
    %c0_i32_0 = arith.constant 0 : i32
    %c0_i32_1 = arith.constant 0 : i32
    return %c0_i32, %c0_i32_0 : i32, i32
  }
  func.func @transform_4(%arg0: i32) -> (i32, i32) {
    %c0_i32 = arith.constant 0 : i32
    %c0_i32_0 = arith.constant 0 : i32
    %c0_i32_1 = arith.constant 0 : i32
    return %c0_i32, %c0_i32_0 : i32, i32
  }
}

</mosaic_0001>

<llo_original>
// kernel: tpu_custom_call.1
$region0: #{tpu_custom_call.1}
  #allocation0 [shape = 'u32[]', space=smem, size = 0x4, offset = 0x4, fixed_abs, tag = 'smem constant byte address 0x4 - core index']
  #allocation1 [shape = 'u32[72,128]{1,0:T(1,128)}', space=vmem, size = 0x9000, scoped, tag = 'internal scratch']
  #allocation2 [shape = 'f32[1,1]{1,0:T(1,128)S(6)}', space=smem, size = 0x200, scoped, tag = 'scoped memory for tpu_custom_call.1']
  %s0 = inlined_call_operand.hbm [shape: f32[197,128], index: 0, kind: input, shape index: {}]
  %s1 = inlined_call_operand.hbm [shape: f32[8,128], index: 1, kind: input, shape index: {}]
  %s2 = inlined_call_operand.vmem [shape: f32[1,128], index: 2, kind: input, shape index: {}]
  %s3 = inlined_call_operand.<no memory space> [shape: f32[1,1], index: 3, kind: input, shape index: {}]
  %s4 = inlined_call_operand.hbm [shape: f32[197,128], index: 4, kind: output, shape index: {}]
  %s5 = sld [smem:[#allocation0]]
  $region34: #{tpu_custom_call.1} parent=0
    _
  %s7 = ssub.s32 1, %s5
  %s8 = scalar_select 0, %s7, %s5
  %9 = sst [smem:[#allocation2]] %s3
  $region1: #{tpu_custom_call.1} parent=0
    #allocation3 [shape = 'u8[102400]{0}', space=vmem, size = 0x19000, scoped, tag = 'input window, operand 0, single buffered']
    #allocation4 [shape = 's32[1]{0}', space=sflag, size = 0x4, scoped, tag = 'scoped memory for tpu_custom_call.1']
    #allocation5 [shape = 's32[1]{0}', space=sflag, size = 0x4, scoped, tag = 'scoped memory for tpu_custom_call.1']
    #allocation6 [shape = 'u8[4096]{0}', space=vmem, size = 0x1000, scoped, tag = 'input window, operand 1, single buffered']
    #allocation7 [shape = 's32[1]{0}', space=sflag, size = 0x4, scoped, tag = 'scoped memory for tpu_custom_call.1']
    #allocation8 [shape = 'u8[102400]{0}', space=vmem, size = 0x19000, scoped, tag = 'output window, operand 0, single buffered']
    %10 = vsyncpa [#allocation4], 0
    %11 = vsyncpa [#allocation7], 0
    %12 = vsyncpa [#allocation5], 0
    // Predicated region
    $region2: #{tpu_custom_call.1} parent=1 // pred_check
      _
    $region3: #{tpu_custom_call.1} parent=1 // pred_check_branch
      %14 = sbr.rel (0) target = $region5
    $region4: #{tpu_custom_call.1} parent=1 // pred_region
      %16 = vsyncadd [#allocation4], 0
      %s17 = sshll.u32 %s0, 4
      %s18 = int_to_ptr.hbm [resolvable:$true] %s17
      %s19 = sshll.u32 [#allocation3], 4
      %s20 = int_to_ptr.vmem [resolvable:$true] %s19
      %25 = dma.hbm_to_vmem [thread:$0]  %s18, 3200, %s20, [#allocation4], 128, 128, 8
    $region5: #{tpu_custom_call.1} parent=1 // pred_fallthru
      _
    // Predicated region
    $region6: #{tpu_custom_call.1} parent=1 // pred_check
      _
    $region7: #{tpu_custom_call.1} parent=1 // pred_check_branch
      %27 = sbr.rel (0) target = $region9
    $region8: #{tpu_custom_call.1} parent=1 // pred_region
      %29 = vsyncadd [#allocation7], 0
      %s31 = sshll.u32 %s1, 4
      %s32 = int_to_ptr.hbm [resolvable:$true] %s31
      %s33 = sshll.u32 [#allocation6], 4
      %s34 = int_to_ptr.vmem [resolvable:$true] %s33
      %36 = dma.hbm_to_vmem [thread:$0]  %s32, 128, %s34, [#allocation7]
    $region9: #{tpu_custom_call.1} parent=1 // pred_fallthru
      _
    // Predicated region
    $region10: #{tpu_custom_call.1} parent=1 // pred_check
      _
    $region11: #{tpu_custom_call.1} parent=1 // pred_check_branch
      %38 = sbr.rel (0) target = $region13
    $region12: #{tpu_custom_call.1} parent=1 // pred_region
      _
    $region13: #{tpu_custom_call.1} parent=1 // pred_fallthru
      _
    // Predicated region
    $region14: #{tpu_custom_call.1} parent=1 // pred_check
      _
    $region15: #{tpu_custom_call.1} parent=1 // pred_check_branch
      %40 = sbr.rel (0) target = $region17
    $region16: #{tpu_custom_call.1} parent=1 // pred_region
      _
    $region17: #{tpu_custom_call.1} parent=1 // pred_fallthru
      _
    // Predicated region
    $region18: #{tpu_custom_call.1} parent=1 // pred_check
      _
    $region19: #{tpu_custom_call.1} parent=1 // pred_check_branch
      %42 = sbr.rel (0) target = $region21
    $region20: #{tpu_custom_call.1} parent=1 // pred_region
      %44 = dma.done [#allocation4], 3200
    $region21: #{tpu_custom_call.1} parent=1 // pred_fallthru
      _
    // Predicated region
    $region22: #{tpu_custom_call.1} parent=1 // pred_check
      _
    $region23: #{tpu_custom_call.1} parent=1 // pred_check_branch
      %46 = sbr.rel (0) target = $region25
    $region24: #{tpu_custom_call.1} parent=1 // pred_region
      %48 = dma.done [#allocation7], 128
    $region25: #{tpu_custom_call.1} parent=1 // pred_fallthru
      _
    %v49 = vld [vmem:[#allocation6] sm:$0xff]
    %v50 = vld [vmem:[#allocation3] sm:$0xff]
    %v51 = vld [vmem:[#allocation3 + $0x8] sm:$0xff]
    %v52 = vld [vmem:[#allocation3 + $0x10] sm:$0xff]
    %v53 = vld [vmem:[#allocation3 + $0x18] sm:$0xff]
    %v54 = vld [vmem:[#allocation3 + $0x20] sm:$0xff]
    %v55 = vld [vmem:[#allocation3 + $0x28] sm:$0xff]
    %v56 = vld [vmem:[#allocation3 + $0x30] sm:$0xff]
    %v57 = vld [vmem:[#allocation3 + $0x38] sm:$0xff]
    %v58 = vld [vmem:[#allocation3 + $0x40] sm:$0xff]
    %v59 = vld [vmem:[#allocation3 + $0x48] sm:$0xff]
    %v60 = vld [vmem:[#allocation3 + $0x50] sm:$0xff]
    %v61 = vld [vmem:[#allocation3 + $0x58] sm:$0xff]
    %v62 = vld [vmem:[#allocation3 + $0x60] sm:$0xff]
    %v63 = vld [vmem:[#allocation3 + $0x68] sm:$0xff]
    %v64 = vld [vmem:[#allocation3 + $0x70] sm:$0xff]
    %v65 = vld [vmem:[#allocation3 + $0x78] sm:$0xff]
    %v66 = vld [vmem:[#allocation3 + $0x80] sm:$0xff]
    %v67 = vld [vmem:[#allocation3 + $0x88] sm:$0xff]
    %v68 = vld [vmem:[#allocation3 + $0x90] sm:$0xff]
    %v69 = vld [vmem:[#allocation3 + $0x98] sm:$0xff]
    %v70 = vld [vmem:[#allocation3 + $0xa0] sm:$0xff]
    %v71 = vld [vmem:[#allocation3 + $0xa8] sm:$0xff]
    %v72 = vld [vmem:[#allocation3 + $0xb0] sm:$0xff]
    %v73 = vld [vmem:[#allocation3 + $0xb8] sm:$0xff]
    %v74 = vld [vmem:[#allocation3 + $0xc0] sm:$0x1f]
    %75 = vmatpush.xpose.msra.mxu0 %v65
    %76 = vmatpush.xpose.msra.mxu0 %v64
    %77 = vmatpush.xpose.msra.mxu0 %v63
    %78 = vmatpush.xpose.msra.mxu0 %v62
    %79 = vmatpush.xpose.msra.mxu0 %v61
    %80 = vmatpush.xpose.msra.mxu0 %v60
    %81 = vmatpush.xpose.msra.mxu0 %v59
    %82 = vmatpush.xpose.msra.mxu0 %v58
    %83 = vmatpush.xpose.msra.mxu0 %v57
    %84 = vmatpush.xpose.msra.mxu0 %v56
    %85 = vmatpush.xpose.msra.mxu0 %v55
    %86 = vmatpush.xpose.msra.mxu0 %v54
    %87 = vmatpush.xpose.msra.mxu0 %v53
    %88 = vmatpush.xpose.msra.mxu0 %v52
    %89 = vmatpush.xpose.msra.mxu0 %v51
    %90 = vmatpush.xpose.msra.mxu0 %v50
    %91 = vmatmul.f32.gmra.mxu0 %v49
    %v92 = vpop.f32.mrf.mxu0
    %v93 = vadd.f32 0.0, %v92
    %94 = vdwg.mxu0
    %95 = vmatpush.xpose.msra.mxu0 0.0
    %96 = vmatpush.xpose.msra.mxu0 0.0
    %97 = vmatpush.xpose.msra.mxu0 0.0
    %98 = vmatpush.xpose.msra.mxu0 0.0
    %99 = vmatpush.xpose.msra.mxu0 0.0
    %100 = vmatpush.xpose.msra.mxu0 0.0
    %101 = vmatpush.xpose.msra.mxu0 0.0
    %102 = vmatpush.xpose.msra.mxu0 %v74
    %103 = vmatpush.xpose.msra.mxu0 %v73
    %104 = vmatpush.xpose.msra.mxu0 %v72
    %105 = vmatpush.xpose.msra.mxu0 %v71
    %106 = vmatpush.xpose.msra.mxu0 %v70
    %107 = vmatpush.xpose.msra.mxu0 %v69
    %108 = vmatpush.xpose.msra.mxu0 %v68
    %109 = vmatpush.xpose.msra.mxu0 %v67
    %110 = vmatpush.xpose.msra.mxu0 %v66
    %111 = vmatmul.f32.gmra.mxu0 %v49
    %v112 = vpop.f32.mrf.mxu0
    %v113 = vadd.f32 0.0, %v112
    %114 = vdwg.mxu0
    %vm115 = vcmask 564224
    %v116 = vsel %vm115, %v113, -inf
    %v117 = vmax.f32 %v93, %v116
    %118 = vmax.xlane.f32.xlu0 %v117
    %v119 = vpop.xlane.xlu0 %118
    %v120 = vsub.f32 %v93, %v119
    %v121 = vsub.f32 %v113, %v119
    %v122 = vmul.f32 %v120, 1.442695
    %v123 = vpow.pop %v122
    %v124 = vmul.f32 %v121, 1.442695
    %v125 = vpow.pop %v124
    %v126 = vsel %vm115, %v125, 0.0
    %v127 = vadd.f32 %v123, %v126
    %128 = vadd.xlane.f32.xlu0 %v127
    %v129 = vpop.xlane.xlu0 %128
    %s130 = sld [smem:[#allocation2]]
    %v131 = vrcp.pop 8.0
    %v132 = vmul.f32 8.0, %v131
    %v133 = vsub.f32 1.0, %v132
    %v134 = vmul.f32 %v131, %v133
    %v135 = vadd.f32 %v131, %v134
    %vm136 = vweird.f32 %v131
    %v137 = vsel %vm136, %v131, %v135
    %s138 = vtos %v137
    %s139 = smul.f32 %s130, %s138
    %v140 = vrcp.pop %v129
    %v141 = vmul.f32 %v129, %v140
    %v142 = vsub.f32 1.0, %v141
    %v143 = vmul.f32 %v140, %v142
    %v144 = vadd.f32 %v140, %v143
    %vm145 = vweird.f32 %v129
    %vm146 = vweird.f32 %v140
    %vm147 = vmor %vm145, %vm146
    %v148 = vsel %vm147, %v140, %v144
    %v149 = vand.u32 2147483647, %v129
    %vm150 = vcmp.eq.f32.partialorder %v149, 8.507059e+37
    %v151 = vand.u32 %v129, 2147483648
    %v152 = vor.u32 1.1754944e-38, %v151
    %v153 = vsel %vm150, %v152, %v148
    %v154 = vstv %s139
    %v155 = vmul.f32 %v154, %v153
    %v156 = vld [vmem:[%s2] sm:$0x1]
    %v158 = vperm.slane %v156, 0
    %v160 = vmul.f32 %v50, %v158
    %v161 = vmul.f32 %v51, %v158
    %v162 = vmul.f32 %v52, %v158
    %v163 = vmul.f32 %v53, %v158
    %v164 = vmul.f32 %v54, %v158
    %v165 = vmul.f32 %v55, %v158
    %v166 = vmul.f32 %v56, %v158
    %v167 = vmul.f32 %v57, %v158
    %v168 = vmul.f32 %v58, %v158
    %v169 = vmul.f32 %v59, %v158
    %v170 = vmul.f32 %v60, %v158
    %v171 = vmul.f32 %v61, %v158
    %v172 = vmul.f32 %v62, %v158
    %v173 = vmul.f32 %v63, %v158
    %v174 = vmul.f32 %v64, %v158
    %v175 = vmul.f32 %v65, %v158
    %v176 = vmul.f32 %v66, %v158
    %v177 = vmul.f32 %v67, %v158
    %v178 = vmul.f32 %v68, %v158
    %v179 = vmul.f32 %v69, %v158
    %v180 = vmul.f32 %v70, %v158
    %v181 = vmul.f32 %v71, %v158
    %v182 = vmul.f32 %v72, %v158
    %v183 = vmul.f32 %v73, %v158
    %v184 = vmul.f32 %v74, %v158
    %185 = vxpose.xlu0.b32.start [1/16] %v123, 128
    %186 = vxpose.xlu0.b32.cont [2/16] 0.0, 128
    %187 = vxpose.xlu0.b32.cont [3/16] 0.0, 128
    %188 = vxpose.xlu0.b32.cont [4/16] 0.0, 128
    %189 = vxpose.xlu0.b32.cont [5/16] 0.0, 128
    %190 = vxpose.xlu0.b32.cont [6/16] 0.0, 128
    %191 = vxpose.xlu0.b32.cont [7/16] 0.0, 128
    %192 = vxpose.xlu0.b32.cont [8/16] 0.0, 128
    %193 = vxpose.xlu0.b32.cont [9/16] 0.0, 128
    %194 = vxpose.xlu0.b32.cont [10/16] 0.0, 128
    %195 = vxpose.xlu0.b32.cont [11/16] 0.0, 128
    %196 = vxpose.xlu0.b32.cont [12/16] 0.0, 128
    %197 = vxpose.xlu0.b32.cont [13/16] 0.0, 128
    %198 = vxpose.xlu0.b32.cont [14/16] 0.0, 128
    %199 = vxpose.xlu0.b32.cont [15/16] 0.0, 128
    %200 = vxpose.xlu0.b32.end [16/16] 0.0, 128
    %v201 = vpop.trf.xlu0
    %v202 = vpop.trf.xlu0
    %v203 = vpop.trf.xlu0
    %v204 = vpop.trf.xlu0
    %v205 = vpop.trf.xlu0
    %v206 = vpop.trf.xlu0
    %v207 = vpop.trf.xlu0
    %v208 = vpop.trf.xlu0
    %v209 = vpop.trf.xlu0
    %v210 = vpop.trf.xlu0
    %v211 = vpop.trf.xlu0
    %v212 = vpop.trf.xlu0
    %v213 = vpop.trf.xlu0
    %v214 = vpop.trf.xlu0
    %v215 = vpop.trf.xlu0
    %v216 = vpop.trf.xlu0
    %217 = vxpose.xlu0.b32.start [1/16] %v125, 128
    %218 = vxpose.xlu0.b32.cont [2/16] 0.0, 128
    %219 = vxpose.xlu0.b32.cont [3/16] 0.0, 128
    %220 = vxpose.xlu0.b32.cont [4/16] 0.0, 128
    %221 = vxpose.xlu0.b32.cont [5/16] 0.0, 128
    %222 = vxpose.xlu0.b32.cont [6/16] 0.0, 128
    %223 = vxpose.xlu0.b32.cont [7/16] 0.0, 128
    %224 = vxpose.xlu0.b32.cont [8/16] 0.0, 128
    %225 = vxpose.xlu0.b32.cont [9/16] 0.0, 128
    %226 = vxpose.xlu0.b32.cont [10/16] 0.0, 128
    %227 = vxpose.xlu0.b32.cont [11/16] 0.0, 128
    %228 = vxpose.xlu0.b32.cont [12/16] 0.0, 128
    %229 = vxpose.xlu0.b32.cont [13/16] 0.0, 128
    %230 = vxpose.xlu0.b32.cont [14/16] 0.0, 128
    %231 = vxpose.xlu0.b32.cont [15/16] 0.0, 128
    %232 = vxpose.xlu0.b32.end [16/16] 0.0, 128
    %v233 = vpop.trf.xlu0
    %v234 = vpop.trf.xlu0
    %v235 = vpop.trf.xlu0
    %v236 = vpop.trf.xlu0
    %v237 = vpop.trf.xlu0
    %v238 = vpop.trf.xlu0
    %v239 = vpop.trf.xlu0
    %v240 = vpop.trf.xlu0
    %v241 = vpop.trf.xlu0
    %v242 = vpop.trf.xlu0
    %v243 = vpop.trf.xlu0
    %v244 = vpop.trf.xlu0
    %v245 = vpop.trf.xlu0
    %v246 = vpop.trf.xlu0
    %v247 = vpop.trf.xlu0
    %v248 = vpop.trf.xlu0
    %vm249 = vcmask 64512
    %v251 = vsel %vm249, %v201, 0
    %v254 = vsel %vm249, %v202, 0
    %v257 = vsel %vm249, %v203, 0
    %v260 = vsel %vm249, %v204, 0
    %v263 = vsel %vm249, %v205, 0
    %v266 = vsel %vm249, %v206, 0
    %v269 = vsel %vm249, %v207, 0
    %v272 = vsel %vm249, %v208, 0
    %v275 = vsel %vm249, %v209, 0
    %v278 = vsel %vm249, %v210, 0
    %v281 = vsel %vm249, %v211, 0
    %v284 = vsel %vm249, %v212, 0
    %v287 = vsel %vm249, %v213, 0
    %v290 = vsel %vm249, %v214, 0
    %v293 = vsel %vm249, %v215, 0
    %v296 = vsel %vm249, %v216, 0
    %v299 = vsel %vm249, %v233, 0
    %v302 = vsel %vm249, %v234, 0
    %v305 = vsel %vm249, %v235, 0
    %v308 = vsel %vm249, %v236, 0
    %v311 = vsel %vm249, %v237, 0
    %v314 = vsel %vm249, %v238, 0
    %v317 = vsel %vm249, %v239, 0
    %v320 = vsel %vm249, %v240, 0
    %v323 = vsel %vm249, %v241, 0
    %325 = vmatpush.msra.mxu0 0.0
    %326 = vmatpush.msra.mxu0 0.0
    %327 = vmatpush.msra.mxu0 0.0
    %328 = vmatpush.msra.mxu0 0.0
    %329 = vmatpush.msra.mxu0 0.0
    %330 = vmatpush.msra.mxu0 0.0
    %331 = vmatpush.msra.mxu0 0.0
    %332 = vmatpush.msra.mxu0 0.0
    %333 = vmatpush.msra.mxu0 0.0
    %334 = vmatpush.msra.mxu0 0.0
    %335 = vmatpush.msra.mxu0 0.0
    %336 = vmatpush.msra.mxu0 0.0
    %337 = vmatpush.msra.mxu0 0.0
    %338 = vmatpush.msra.mxu0 0.0
    %339 = vmatpush.msra.mxu0 0.0
    %340 = vmatpush.msra.mxu0 %v155
    %341 = vmatmul.f32.gmra.mxu0 %v251
    %v342 = vpop.f32.mrf.mxu0
    %v343 = vadd.f32 1.0, %v342
    %344 = vmatmul.f32.gmra.mxu0 %v254
    %v345 = vpop.f32.mrf.mxu0
    %v346 = vadd.f32 1.0, %v345
    %347 = vmatmul.f32.gmra.mxu0 %v257
    %v348 = vpop.f32.mrf.mxu0
    %v349 = vadd.f32 1.0, %v348
    %350 = vmatmul.f32.gmra.mxu0 %v260
    %v351 = vpop.f32.mrf.mxu0
    %v352 = vadd.f32 1.0, %v351
    %353 = vmatmul.f32.gmra.mxu0 %v263
    %v354 = vpop.f32.mrf.mxu0
    %v355 = vadd.f32 1.0, %v354
    %356 = vmatmul.f32.gmra.mxu0 %v266
    %v357 = vpop.f32.mrf.mxu0
    %v358 = vadd.f32 1.0, %v357
    %359 = vmatmul.f32.gmra.mxu0 %v269
    %v360 = vpop.f32.mrf.mxu0
    %v361 = vadd.f32 1.0, %v360
    %362 = vmatmul.f32.gmra.mxu0 %v272
    %v363 = vpop.f32.mrf.mxu0
    %v364 = vadd.f32 1.0, %v363
    %365 = vmatmul.f32.gmra.mxu0 %v275
    %v366 = vpop.f32.mrf.mxu0
    %v367 = vadd.f32 1.0, %v366
    %368 = vmatmul.f32.gmra.mxu0 %v278
    %v369 = vpop.f32.mrf.mxu0
    %v370 = vadd.f32 1.0, %v369
    %371 = vmatmul.f32.gmra.mxu0 %v281
    %v372 = vpop.f32.mrf.mxu0
    %v373 = vadd.f32 1.0, %v372
    %374 = vmatmul.f32.gmra.mxu0 %v284
    %v375 = vpop.f32.mrf.mxu0
    %v376 = vadd.f32 1.0, %v375
    %377 = vmatmul.f32.gmra.mxu0 %v287
    %v378 = vpop.f32.mrf.mxu0
    %v379 = vadd.f32 1.0, %v378
    %380 = vmatmul.f32.gmra.mxu0 %v290
    %v381 = vpop.f32.mrf.mxu0
    %v382 = vadd.f32 1.0, %v381
    %383 = vmatmul.f32.gmra.mxu0 %v293
    %v384 = vpop.f32.mrf.mxu0
    %v385 = vadd.f32 1.0, %v384
    %386 = vmatmul.f32.gmra.mxu0 %v296
    %v387 = vpop.f32.mrf.mxu0
    %v388 = vadd.f32 1.0, %v387
    %389 = vmatmul.f32.gmra.mxu0 %v299
    %v390 = vpop.f32.mrf.mxu0
    %v391 = vadd.f32 1.0, %v390
    %392 = vmatmul.f32.gmra.mxu0 %v302
    %v393 = vpop.f32.mrf.mxu0
    %v394 = vadd.f32 1.0, %v393
    %395 = vmatmul.f32.gmra.mxu0 %v305
    %v396 = vpop.f32.mrf.mxu0
    %v397 = vadd.f32 1.0, %v396
    %398 = vmatmul.f32.gmra.mxu0 %v308
    %v399 = vpop.f32.mrf.mxu0
    %v400 = vadd.f32 1.0, %v399
    %401 = vmatmul.f32.gmra.mxu0 %v311
    %v402 = vpop.f32.mrf.mxu0
    %v403 = vadd.f32 1.0, %v402
    %404 = vmatmul.f32.gmra.mxu0 %v314
    %v405 = vpop.f32.mrf.mxu0
    %v406 = vadd.f32 1.0, %v405
    %407 = vmatmul.f32.gmra.mxu0 %v317
    %v408 = vpop.f32.mrf.mxu0
    %v409 = vadd.f32 1.0, %v408
    %410 = vmatmul.f32.gmra.mxu0 %v320
    %v411 = vpop.f32.mrf.mxu0
    %v412 = vadd.f32 1.0, %v411
    %413 = vmatmul.f32.gmra.mxu0 %v323
    %v414 = vpop.f32.mrf.mxu0
    %v415 = vadd.f32 1.0, %v414
    %416 = vdwg.mxu0
    %418 = vset.pattern.permute.xlu0 0
    %419 = vperm.xlu0 %418, %v343
    %v420 = vpop.permute.xlu0 %419
    %423 = vset.pattern.permute.xlu0 0
    %424 = vperm.xlu0 %423, %v346
    %v425 = vpop.permute.xlu0 %424
    %428 = vset.pattern.permute.xlu0 0
    %429 = vperm.xlu0 %428, %v349
    %v430 = vpop.permute.xlu0 %429
    %433 = vset.pattern.permute.xlu0 0
    %434 = vperm.xlu0 %433, %v352
    %v435 = vpop.permute.xlu0 %434
    %438 = vset.pattern.permute.xlu0 0
    %439 = vperm.xlu0 %438, %v355
    %v440 = vpop.permute.xlu0 %439
    %443 = vset.pattern.permute.xlu0 0
    %444 = vperm.xlu0 %443, %v358
    %v445 = vpop.permute.xlu0 %444
    %448 = vset.pattern.permute.xlu0 0
    %449 = vperm.xlu0 %448, %v361
    %v450 = vpop.permute.xlu0 %449
    %453 = vset.pattern.permute.xlu0 0
    %454 = vperm.xlu0 %453, %v364
    %v455 = vpop.permute.xlu0 %454
    %458 = vset.pattern.permute.xlu0 0
    %459 = vperm.xlu0 %458, %v367
    %v460 = vpop.permute.xlu0 %459
    %463 = vset.pattern.permute.xlu0 0
    %464 = vperm.xlu0 %463, %v370
    %v465 = vpop.permute.xlu0 %464
    %468 = vset.pattern.permute.xlu0 0
    %469 = vperm.xlu0 %468, %v373
    %v470 = vpop.permute.xlu0 %469
    %473 = vset.pattern.permute.xlu0 0
    %474 = vperm.xlu0 %473, %v376
    %v475 = vpop.permute.xlu0 %474
    %478 = vset.pattern.permute.xlu0 0
    %479 = vperm.xlu0 %478, %v379
    %v480 = vpop.permute.xlu0 %479
    %483 = vset.pattern.permute.xlu0 0
    %484 = vperm.xlu0 %483, %v382
    %v485 = vpop.permute.xlu0 %484
    %488 = vset.pattern.permute.xlu0 0
    %489 = vperm.xlu0 %488, %v385
    %v490 = vpop.permute.xlu0 %489
    %493 = vset.pattern.permute.xlu0 0
    %494 = vperm.xlu0 %493, %v388
    %v495 = vpop.permute.xlu0 %494
    %498 = vset.pattern.permute.xlu0 0
    %499 = vperm.xlu0 %498, %v391
    %v500 = vpop.permute.xlu0 %499
    %503 = vset.pattern.permute.xlu0 0
    %504 = vperm.xlu0 %503, %v394
    %v505 = vpop.permute.xlu0 %504
    %508 = vset.pattern.permute.xlu0 0
    %509 = vperm.xlu0 %508, %v397
    %v510 = vpop.permute.xlu0 %509
    %513 = vset.pattern.permute.xlu0 0
    %514 = vperm.xlu0 %513, %v400
    %v515 = vpop.permute.xlu0 %514
    %518 = vset.pattern.permute.xlu0 0
    %519 = vperm.xlu0 %518, %v403
    %v520 = vpop.permute.xlu0 %519
    %523 = vset.pattern.permute.xlu0 0
    %524 = vperm.xlu0 %523, %v406
    %v525 = vpop.permute.xlu0 %524
    %528 = vset.pattern.permute.xlu0 0
    %529 = vperm.xlu0 %528, %v409
    %v530 = vpop.permute.xlu0 %529
    %533 = vset.pattern.permute.xlu0 0
    %534 = vperm.xlu0 %533, %v412
    %v535 = vpop.permute.xlu0 %534
    %538 = vset.pattern.permute.xlu0 0
    %539 = vperm.xlu0 %538, %v415
    %v540 = vpop.permute.xlu0 %539
    %v542 = vmul.f32 %v160, %v420
    %v543 = vmul.f32 %v161, %v425
    %v544 = vmul.f32 %v162, %v430
    %v545 = vmul.f32 %v163, %v435
    %v546 = vmul.f32 %v164, %v440
    %v547 = vmul.f32 %v165, %v445
    %v548 = vmul.f32 %v166, %v450
    %v549 = vmul.f32 %v167, %v455
    %v550 = vmul.f32 %v168, %v460
    %v551 = vmul.f32 %v169, %v465
    %v552 = vmul.f32 %v170, %v470
    %v553 = vmul.f32 %v171, %v475
    %v554 = vmul.f32 %v172, %v480
    %v555 = vmul.f32 %v173, %v485
    %v556 = vmul.f32 %v174, %v490
    %v557 = vmul.f32 %v175, %v495
    %v558 = vmul.f32 %v176, %v500
    %v559 = vmul.f32 %v177, %v505
    %v560 = vmul.f32 %v178, %v510
    %v561 = vmul.f32 %v179, %v515
    %v562 = vmul.f32 %v180, %v520
    %v563 = vmul.f32 %v181, %v525
    %v564 = vmul.f32 %v182, %v530
    %v565 = vmul.f32 %v183, %v535
    %v566 = vmul.f32 %v184, %v540
    %567 = vst [vmem:[#allocation8] sm:$0xff] %v542
    %568 = vst [vmem:[#allocation8 + $0x8] sm:$0xff] %v543
    %569 = vst [vmem:[#allocation8 + $0x10] sm:$0xff] %v544
    %570 = vst [vmem:[#allocation8 + $0x18] sm:$0xff] %v545
    %571 = vst [vmem:[#allocation8 + $0x20] sm:$0xff] %v546
    %572 = vst [vmem:[#allocation8 + $0x28] sm:$0xff] %v547
    %573 = vst [vmem:[#allocation8 + $0x30] sm:$0xff] %v548
    %574 = vst [vmem:[#allocation8 + $0x38] sm:$0xff] %v549
    %575 = vst [vmem:[#allocation8 + $0x40] sm:$0xff] %v550
    %576 = vst [vmem:[#allocation8 + $0x48] sm:$0xff] %v551
    %577 = vst [vmem:[#allocation8 + $0x50] sm:$0xff] %v552
    %578 = vst [vmem:[#allocation8 + $0x58] sm:$0xff] %v553
    %579 = vst [vmem:[#allocation8 + $0x60] sm:$0xff] %v554
    %580 = vst [vmem:[#allocation8 + $0x68] sm:$0xff] %v555
    %581 = vst [vmem:[#allocation8 + $0x70] sm:$0xff] %v556
    %582 = vst [vmem:[#allocation8 + $0x78] sm:$0xff] %v557
    %583 = vst [vmem:[#allocation8 + $0x80] sm:$0xff] %v558
    %584 = vst [vmem:[#allocation8 + $0x88] sm:$0xff] %v559
    %585 = vst [vmem:[#allocation8 + $0x90] sm:$0xff] %v560
    %586 = vst [vmem:[#allocation8 + $0x98] sm:$0xff] %v561
    %587 = vst [vmem:[#allocation8 + $0xa0] sm:$0xff] %v562
    %588 = vst [vmem:[#allocation8 + $0xa8] sm:$0xff] %v563
    %589 = vst [vmem:[#allocation8 + $0xb0] sm:$0xff] %v564
    %590 = vst [vmem:[#allocation8 + $0xb8] sm:$0xff] %v565
    %591 = vst [vmem:[#allocation8 + $0xc0] sm:$0x1f] %v566
    // Predicated region
    $region26: #{tpu_custom_call.1} parent=1 // pred_check
      _
    $region27: #{tpu_custom_call.1} parent=1 // pred_check_branch
      %593 = sbr.rel (0) target = $region29
    $region28: #{tpu_custom_call.1} parent=1 // pred_region
      %595 = vsyncadd [#allocation5], 0
      %s596 = sshll.u32 [#allocation8], 4
      %s597 = int_to_ptr.vmem [resolvable:$true] %s596
      %s598 = sshll.u32 %s4, 4
      %s599 = int_to_ptr.hbm [resolvable:$true] %s598
      %604 = dma.vmem_to_hbm [thread:$0]  %s597, 3200, %s599, [#allocation5], 128, 128, 8
    $region29: #{tpu_custom_call.1} parent=1 // pred_fallthru
      _
    // Predicated region
    $region30: #{tpu_custom_call.1} parent=1 // pred_check
      _
    $region31: #{tpu_custom_call.1} parent=1 // pred_check_branch
      %606 = sbr.rel (0) target = $region33
    $region32: #{tpu_custom_call.1} parent=1 // pred_region
      %608 = dma.done [#allocation5], 3200
    $region33: #{tpu_custom_call.1} parent=1 // pred_fallthru
      _
    %609 = vsyncpa [#allocation4], 1
    %610 = vsyncpa [#allocation7], 1
    %611 = vsyncpa [#allocation5], 1

</llo_original>
